<compile_context>
chip_gen: v5e
topology: v5e:2x2
jax: 0.10.0
libtpu: 0.0.40
codegen_flags: <defaults>
</compile_context>

<pallas_src>
import jax
import jax.numpy as jnp
from jax.experimental import pallas as pl
from jax.experimental.pallas import tpu as pltpu


def weight_generator_kernel(x_ref, w_ref, b_ref, o_ref):
    # x_ref: [TILE_B, F] f32 (VMEM, pipelined), w_ref: [1, F] f32 (VMEM,
    # resident), b_ref: [1] f32 (SMEM), o_ref: [TILE_B, 1] f32.
    y = jnp.sum(x_ref[...] * w_ref[...], axis=-1, keepdims=True) + b_ref[0]
    o_ref[...] = jax.nn.sigmoid(y).astype(o_ref.dtype)


def _round_up(n, m):
    return (n + m - 1) // m * m


def weight_generator_forward(x, w1, b1, w2, b2, *, tile_b=1024):
    """sigmoid((x @ w1 + b1) @ w2 + b2).

    x: [B, F]; w1: [F, H]; b1: [H]; w2: [H, 1]; b2: [1]  (weights stored
    [in, out] relative to torch's nn.Linear).  Returns [B, 1] float32.
    """
    B, F = x.shape
    H = w1.shape[1]
    assert b1.shape == (H,) and w2.shape == (H, 1) and b2.shape == (1,)

    x = x.astype(jnp.float32)
    # Exact affine collapse (the module has no activation between fc1/fc2).
    w_eff = (w1.astype(jnp.float32) @ w2.astype(jnp.float32)).reshape(1, F)
    b_eff = (b1.astype(jnp.float32) @ w2[:, 0].astype(jnp.float32)
             + b2.astype(jnp.float32)[0]).reshape(1)

    # Tile sizing: multiple of 8 sublanes, no larger than the padded batch,
    # and small enough that the double-buffered x block stays <= ~24 MiB
    # (fits the scoped-VMEM default on v5e/v6e and the 64 MiB v7x budget).
    max_cols = max(8, (24 * 2**20) // (2 * F * 4) // 8 * 8)
    tile_b = max(8, min(_round_up(tile_b, 8), _round_up(B, 8), max_cols))
    num_tiles = pl.cdiv(B, tile_b)
    b_pad = num_tiles * tile_b
    x_pad = jnp.pad(x, ((0, b_pad - B), (0, 0))) if b_pad != B else x

    vmem_limit = min(64 * 2**20,
                     max(16 * 2**20, 2 * tile_b * F * 4 + 4 * 2**20))

    out = pl.pallas_call(
        weight_generator_kernel,
        out_shape=jax.ShapeDtypeStruct((b_pad, 1), jnp.float32),
        grid=(num_tiles,),
        in_specs=[
            # x tile: auto double-buffered / pipelined across grid steps.
            pl.BlockSpec((tile_b, F), lambda i: (i, 0)),
            # collapsed weight vector: VMEM-resident (constant index_map).
            pl.BlockSpec((1, F), lambda i: (0, 0)),
            # collapsed bias: one scalar, kept in SMEM (no padded VMEM tile).
            pl.BlockSpec(memory_space=pltpu.MemorySpace.SMEM),
        ],
        out_specs=pl.BlockSpec((tile_b, 1), lambda i: (i, 0)),
        compiler_params=pltpu.CompilerParams(
            # v7x megacore shards this axis across its 2 TCs; at production
            # batch sizes keep num_tiles >= ~8 so each core pipelines steps.
            dimension_semantics=("parallel",),
            vmem_limit_bytes=vmem_limit,
        ),
    )(x_pad, w_eff, b_eff)

    return out[:B]


def init_params(key, fea_dim, hidden=256):
    """Same init family as torch nn.Linear (U(-1/sqrt(fan_in), 1/sqrt(fan_in)));
    weights stored [in, out] relative to torch."""
    k1, k2, k3, k4 = jax.random.split(key, 4)
    bound1 = 1.0 / jnp.sqrt(fea_dim)
    bound2 = 1.0 / jnp.sqrt(hidden)
    w1 = jax.random.uniform(k1, (fea_dim, hidden), jnp.float32, -bound1, bound1)
    b1 = jax.random.uniform(k2, (hidden,), jnp.float32, -bound1, bound1)
    w2 = jax.random.uniform(k3, (hidden, 1), jnp.float32, -bound2, bound2)
    b2 = jax.random.uniform(k4, (1,), jnp.float32, -bound2, bound2)
    return w1, b1, w2, b2


if __name__ == "__main__":
    # Small shapes consistent with the module (hidden=256 is fixed by it,
    # fea_dim is the constructor arg).  B=200 with tile_b=64 exercises a
    # multi-step grid plus the ragged-edge batch padding; the second call
    # uses the default (large-tile) path.
    B, FEA_DIM, HIDDEN = 200, 128, 256
    key = jax.random.PRNGKey(0)
    kx, kp = jax.random.split(key)

    x = jax.random.normal(kx, (B, FEA_DIM), jnp.float32)
    w1, b1, w2, b2 = init_params(kp, FEA_DIM, HIDDEN)

    ref = jax.nn.sigmoid((x @ w1 + b1) @ w2 + b2)  # pure-f32 two-layer reference

    # Multi-tile path (4 grid steps, batch padded 200 -> 256 then sliced back).
    out_small = jax.block_until_ready(
        weight_generator_forward(x, w1, b1, w2, b2, tile_b=64))
    assert out_small.shape == (B, 1)
    assert bool(jnp.all(jnp.isfinite(out_small)))
    assert jnp.allclose(out_small, ref, atol=1e-4, rtol=1e-4)

    # Default path: tile_b clamps to the (8-aligned) batch -> single grid step.
    out_big = jax.block_until_ready(weight_generator_forward(x, w1, b1, w2, b2))
    assert out_big.shape == (B, 1)
    assert jnp.allclose(out_big, ref, atol=1e-4, rtol=1e-4)

    print("KERNEL_OK")
</pallas_src>

<mosaic_0001>
module attributes {stable_mosaic.version = 11 : i64} {
  func.func @weight_generator_kernel(%arg0: i32, %arg1: memref<64x128xf32, #tpu.memory_space<vmem>>, %arg2: memref<1x128xf32, #tpu.memory_space<vmem>>, %arg3: memref<1xf32, #tpu.memory_space<smem>>, %arg4: memref<64x1xf32, #tpu.memory_space<vmem>>) attributes {dimension_semantics = [#tpu.dimension_semantics<parallel>], iteration_bounds = array<i64: 4>, scalar_prefetch = 0 : i64, scratch_operands = 0 : i64, tpu.core_type = #tpu.core_type<tc>, window_params = [{transform_indices = @transform_0, window_bounds = array<i64: 64, 128>}, {pipeline_mode = #tpu.pipeline_mode<synchronous>, transform_indices = @transform_1, window_bounds = array<i64: 1, 128>}, {transform_indices = @transform_2, window_bounds = array<i64: 1>}, {transform_indices = @transform_3, window_bounds = array<i64: 64, 1>}]} {
    %c0 = arith.constant 0 : index
    %c0_0 = arith.constant 0 : index
    %0 = vector.load %arg1[%c0, %c0_0] : memref<64x128xf32, #tpu.memory_space<vmem>>, vector<64x128xf32>
    %c0_1 = arith.constant 0 : index
    %c0_2 = arith.constant 0 : index
    %1 = vector.load %arg2[%c0_1, %c0_2] : memref<1x128xf32, #tpu.memory_space<vmem>>, vector<1x128xf32>
    %2 = vector.broadcast %1 : vector<1x128xf32> to vector<64x128xf32>
    %3 = arith.mulf %0, %2 : vector<64x128xf32>
    %cst = arith.constant dense<0.000000e+00> : vector<64xf32>
    %4 = vector.multi_reduction <add>, %3, %cst [1] : vector<64x128xf32> to vector<64xf32>
    %5 = vector.shape_cast %4 : vector<64xf32> to vector<64x1xf32>
    %c0_3 = arith.constant 0 : index
    %6 = memref.load %arg3[%c0_3] : memref<1xf32, #tpu.memory_space<smem>>
    %7 = vector.broadcast %6 : f32 to vector<64x1xf32>
    %8 = arith.addf %5, %7 : vector<64x1xf32>
    %9 = arith.negf %8 : vector<64x1xf32>
    %10 = math.exp %9 : vector<64x1xf32>
    %cst_4 = arith.constant 1.000000e+00 : f32
    %11 = vector.broadcast %cst_4 : f32 to vector<64x1xf32>
    %12 = arith.addf %11, %10 : vector<64x1xf32>
    %13 = arith.divf %11, %12 : vector<64x1xf32>
    %c0_5 = arith.constant 0 : index
    %c0_6 = arith.constant 0 : index
    %14 = vector.load %arg4[%c0_5, %c0_6] : memref<64x1xf32, #tpu.memory_space<vmem>>, vector<64x1xf32>
    tpu.vector_store %arg4[%c0_5, %c0_6], %13 {strides = array<i32>} : memref<64x1xf32, #tpu.memory_space<vmem>>, vector<64x1xf32>,
    return
  }
  func.func @transform_0(%arg0: i32) -> (i32, i32) {
    %c0_i32 = arith.constant 0 : i32
    %c0_i32_0 = arith.constant 0 : i32
    return %arg0, %c0_i32 : i32, i32
  }
  func.func @transform_1(%arg0: i32) -> (i32, i32) {
    %c0_i32 = arith.constant 0 : i32
    %c0_i32_0 = arith.constant 0 : i32
    %c0_i32_1 = arith.constant 0 : i32
    return %c0_i32, %c0_i32_0 : i32, i32
  }
  func.func @transform_2(%arg0: i32) -> i32 {
    %c0_i32 = arith.constant 0 : i32
    %c0_i32_0 = arith.constant 0 : i32
    return %c0_i32 : i32
  }
  func.func @transform_3(%arg0: i32) -> (i32, i32) {
    %c0_i32 = arith.constant 0 : i32
    %c0_i32_0 = arith.constant 0 : i32
    return %arg0, %c0_i32 : i32, i32
  }
}

</mosaic_0001>

<llo_original>
// kernel: tpu_custom_call.1
$region0: #{tpu_custom_call.1}
  #allocation0 [shape = 'u32[]', space=smem, size = 0x4, offset = 0x4, fixed_abs, tag = 'smem constant byte address 0x4 - core index']
  #allocation1 [shape = 'u32[72,128]{1,0:T(1,128)}', space=vmem, size = 0x9000, scoped, tag = 'internal scratch']
  #allocation2 [shape = 'f32[1]{0:T(128)S(6)}', space=smem, size = 0x200, scoped, tag = 'scoped memory for tpu_custom_call.1']
  %s0 = inlined_call_operand.hbm [shape: f32[256,128], index: 0, kind: input, shape index: {}]
  %s1 = inlined_call_operand.vmem [shape: f32[1,128], index: 1, kind: input, shape index: {}]
  %s2 = inlined_call_operand.<no memory space> [shape: f32[1], index: 2, kind: input, shape index: {}]
  %s3 = inlined_call_operand.vmem [shape: f32[256,1], index: 3, kind: output, shape index: {}]
  %s4 = sld [smem:[#allocation0]]
  $region49: #{tpu_custom_call.1} parent=0
    _
  %s6 = ssub.s32 1, %s4
  %s7 = scalar_select 0, %s6, %s4
  %8 = sst [smem:[#allocation2]] %s2
  $region1: #{tpu_custom_call.1} parent=0
    #allocation3 [shape = 'u8[65536]{0}', space=vmem, size = 0x10000, scoped, tag = 'input window, operand 0']
    #allocation4 [shape = 's32[2]{0}', space=sflag, size = 0x8, scoped, tag = 'scoped memory for tpu_custom_call.1']
    %9 = vsyncpa [#allocation4], 0
    %s10 = scalar_lea.sflag [#allocation4], 1
    %11 = vsyncpa %s10, 0
    loop: start=0, step=1, limit=6
    $region2: #{tpu_custom_call.1} parent=1 // loop_pre_header
      _
    $region3: #{tpu_custom_call.1} parent=1 // loop_header
      %s13 = sphi 0, %s17
      %p14 = scmp.ge.s32.totalorder %s13, 6
      %s23 = sphi 0, %s25
      %s26 = sphi 0, %s23
      %s27 = sphi 0, %s26
      %s43 = sphi 0, %s27
      %s47 = sphi 0, %s47
      %s49 = sphi 0, %s47
      %s50 = sphi 0, %s49
      %s64 = sphi 0, %s50
      %s68 = sphi 0, %s68
      %s70 = sphi 0, %s68
      %s71 = sphi 0, %s70
      %s85 = sphi 0, %s71
      %s91 = sphi 0, %s93
      %s94 = sphi 0, %s91
      %s95 = sphi 0, %s94
      %s111 = sphi 0, %s95
    $region4: #{tpu_custom_call.1} parent=1 // loop_header_branch
      %16 = sbr.rel (%p14) target = $region8
    $region5: #{tpu_custom_call.1} parent=1 // loop_body
      %s18 = ssub.s32 %s13, 1
      %s19 = ssub.s32 %s13, 2
      %s20 = sadd.s32 %s13, 1
      %s21 = ssub.s32 %s13, %s20
      %p22 = scmp.eq.s32.totalorder %s21, 0
      %s24 = sadd.s32 %s23, 1
      %s25 = scalar_select %p22, %s23, %s24
      %p28 = pneg %p22
      %p29 = scmp.eq.s32.totalorder %s13, 3
      %p30 = por %p28, %p29
      %p31 = scmp.ne.s32.totalorder %s23, %s26
      %p32 = scmp.eq.s32.totalorder %s13, 0
      %p33 = por %p31, %p32
      %p34 = scmp.ne.s32.totalorder %s23, %s26
      %p35 = scmp.eq.s32.totalorder %s18, 3
      %p36 = por %p34, %p35
      %p37 = scmp.ne.s32.totalorder %s26, %s27
      %p38 = scmp.eq.s32.totalorder %s18, 0
      %p39 = por %p37, %p38
      %p40 = scmp.ne.s32.totalorder %s26, %s27
      %p41 = scmp.eq.s32.totalorder %s19, 3
      %p42 = por %p40, %p41
      %p44 = scmp.ne.s32.totalorder %s27, %s43
      %p45 = scmp.eq.s32.totalorder %s19, 0
      %p46 = por %p44, %p45
      %s48 = sadd.s32 %s47, 1
      %p51 = scmp.eq.s32.totalorder %s13, 3
      %p52 = scmp.ne.s32.totalorder %s47, %s49
      %p53 = scmp.eq.s32.totalorder %s13, 0
      %p54 = por %p52, %p53
      %p55 = scmp.ne.s32.totalorder %s47, %s49
      %p56 = scmp.eq.s32.totalorder %s18, 3
      %p57 = por %p55, %p56
      %p58 = scmp.ne.s32.totalorder %s49, %s50
      %p59 = scmp.eq.s32.totalorder %s18, 0
      %p60 = por %p58, %p59
      %p61 = scmp.ne.s32.totalorder %s49, %s50
      %p62 = scmp.eq.s32.totalorder %s19, 3
      %p63 = por %p61, %p62
      %p65 = scmp.ne.s32.totalorder %s50, %s64
      %p66 = scmp.eq.s32.totalorder %s19, 0
      %p67 = por %p65, %p66
      %s69 = sadd.s32 %s68, 1
      %p72 = scmp.eq.s32.totalorder %s13, 3
      %p73 = scmp.ne.s32.totalorder %s68, %s70
      %p74 = scmp.eq.s32.totalorder %s13, 0
      %p75 = por %p73, %p74
      %p76 = scmp.ne.s32.totalorder %s68, %s70
      %p77 = scmp.eq.s32.totalorder %s18, 3
      %p78 = por %p76, %p77
      %p79 = scmp.ne.s32.totalorder %s70, %s71
      %p80 = scmp.eq.s32.totalorder %s18, 0
      %p81 = por %p79, %p80
      %p82 = scmp.ne.s32.totalorder %s70, %s71
      %p83 = scmp.eq.s32.totalorder %s19, 3
      %p84 = por %p82, %p83
      %p86 = scmp.ne.s32.totalorder %s71, %s85
      %p87 = scmp.eq.s32.totalorder %s19, 0
      %p88 = por %p86, %p87
      %s89 = ssub.s32 %s13, %s20
      %p90 = scmp.eq.s32.totalorder %s89, 0
      %s92 = sadd.s32 %s91, 1
      %s93 = scalar_select %p90, %s91, %s92
      %p96 = pneg %p90
      %p97 = scmp.eq.s32.totalorder %s13, 3
      %p98 = por %p96, %p97
      %p99 = scmp.ne.s32.totalorder %s91, %s94
      %p100 = scmp.eq.s32.totalorder %s13, 0
      %p101 = por %p99, %p100
      %p102 = scmp.ne.s32.totalorder %s91, %s94
      %p103 = scmp.eq.s32.totalorder %s18, 3
      %p104 = por %p102, %p103
      %p105 = scmp.ne.s32.totalorder %s94, %s95
      %p106 = scmp.eq.s32.totalorder %s18, 0
      %p107 = por %p105, %p106
      %p108 = scmp.ne.s32.totalorder %s94, %s95
      %p109 = scmp.eq.s32.totalorder %s19, 3
      %p110 = por %p108, %p109
      %p112 = scmp.ne.s32.totalorder %s95, %s111
      %p113 = scmp.eq.s32.totalorder %s19, 0
      %p114 = por %p112, %p113
      %p115 = scmp.le.s32.totalorder 1, %s13
      %p116 = scmp.lt.s32.totalorder %s13, 5
      %p117 = pnand %p115, %p116
      %p118 = pneg %p117
      // Predicated region
      $region9: #{tpu_custom_call.1} parent=5 // pred_check
        _
      $region10: #{tpu_custom_call.1} parent=5 // pred_check_branch
        %120 = sbr.rel (%p117) target = $region12
      $region11: #{tpu_custom_call.1} parent=5 // pred_region
        %s121 = ssub.s32 %s13, 1
        // Predicated region
        $region13: #{tpu_custom_call.1} parent=11 // pred_check
          %p122 = pneg %p60
        $region14: #{tpu_custom_call.1} parent=11 // pred_check_branch
          %124 = sbr.rel (%p122) target = $region16
        $region15: #{tpu_custom_call.1} parent=11 // pred_region
          _
        $region16: #{tpu_custom_call.1} parent=11 // pred_fallthru
          _
        // Predicated region
        $region17: #{tpu_custom_call.1} parent=11 // pred_check
          %p125 = pneg %p81
        $region18: #{tpu_custom_call.1} parent=11 // pred_check_branch
          %127 = sbr.rel (%p125) target = $region20
        $region19: #{tpu_custom_call.1} parent=11 // pred_region
          _
        $region20: #{tpu_custom_call.1} parent=11 // pred_fallthru
          _
      $region12: #{tpu_custom_call.1} parent=5 // pred_fallthru
        _
      %p128 = scmp.lt.s32.totalorder %s13, 4
      // Predicated region
      $region21: #{tpu_custom_call.1} parent=5 // pred_check
        %p129 = pneg %p128
      $region22: #{tpu_custom_call.1} parent=5 // pred_check_branch
        %131 = sbr.rel (%p129) target = $region24
      $region23: #{tpu_custom_call.1} parent=5 // pred_region
        // Predicated region
        $region25: #{tpu_custom_call.1} parent=23 // pred_check
          %p132 = pneg %p33
        $region26: #{tpu_custom_call.1} parent=23 // pred_check_branch
          %134 = sbr.rel (%p132) target = $region28
        $region27: #{tpu_custom_call.1} parent=23 // pred_region
          %s135 = sand.u32 %s23, 1
          %s136 = scalar_lea.sflag [#allocation4], %s135
          %s137 = sand.u32 %s23, 1
          %s138 = smul.addr %s137, 64
          %s139 = scalar_lea.vmem [#allocation3], %s138
          %s140 = smul.u32 8, %s13
          %142 = vsyncadd %s136, 0
          %s143 = smul.addr %s140, 8
          %s144 = scalar_lea.hbm %s0, %s143
          %s145 = sshll.u32 %s144, 4
          %s146 = int_to_ptr.hbm [resolvable:$true] %s145
          %s147 = sshll.u32 %s139, 4
          %s148 = int_to_ptr.vmem [resolvable:$true] %s147
          %153 = dma.hbm_to_vmem [thread:$0]  %s146, 1024, %s148, %s136, 128, 128, 8
        $region28: #{tpu_custom_call.1} parent=23 // pred_fallthru
          _
      $region24: #{tpu_custom_call.1} parent=5 // pred_fallthru
        _
      %p154 = scmp.le.s32.totalorder 1, %s13
      %p155 = scmp.lt.s32.totalorder %s13, 5
      %p156 = pnand %p154, %p155
      %p157 = pneg %p156
      // Predicated region
      $region29: #{tpu_custom_call.1} parent=5 // pred_check
        _
      $region30: #{tpu_custom_call.1} parent=5 // pred_check_branch
        %159 = sbr.rel (%p156) target = $region32
      $region31: #{tpu_custom_call.1} parent=5 // pred_region
        %s160 = ssub.s32 %s13, 1
        %s161 = sand.u32 %s26, 1
        %s162 = scalar_lea.sflag [#allocation4], %s161
        %s163 = sand.u32 %s26, 1
        %s164 = smul.addr %s163, 64
        %s165 = scalar_lea.vmem [#allocation3], %s164
        // Predicated region
        $region33: #{tpu_custom_call.1} parent=31 // pred_check
          %p166 = pneg %p39
        $region34: #{tpu_custom_call.1} parent=31 // pred_check_branch
          %168 = sbr.rel (%p166) target = $region36
        $region35: #{tpu_custom_call.1} parent=31 // pred_region
          %170 = dma.done %s162, 1024
        $region36: #{tpu_custom_call.1} parent=31 // pred_fallthru
          _
        %s171 = sand.u32 %s26, 1
        %s172 = scalar_lea.sflag [#allocation4], %s171
        %s173 = sand.u32 %s26, 1
        %s174 = smul.addr %s173, 64
        %s175 = scalar_lea.vmem [#allocation3], %s174
        %p176 = pneg %p39
        %p177 = pneg %p36
        %p178 = pneg %p60
        %p179 = pneg %p57
        %p180 = pneg %p81
        %p181 = pneg %p78
        %p182 = pneg %p107
        %p183 = pneg %p104
        %s184 = smul.u32 8, %s18
        %p185 = scmp.lt.s32.totalorder %s184, 31
        %s186 = scalar_select %p185, %s184, 31
        %s187 = smul.addr %s186, 8
        %s188 = scalar_lea.vmem %s3, %s187
        %s189 = smul.u32 8, %s18
        %s190 = smul.u32 8, %s18
        %p191 = scmp.lt.s32.totalorder %s190, 31
        %s192 = scalar_select %p191, %s190, 31
        %s193 = smul.addr %s192, 8
        %s194 = scalar_lea.vmem %s3, %s193
        %s195 = smul.u32 8, %s18
        %v196 = vld [vmem:[%s165] sm:$0xff]
        %v197 = vld [vmem:[%s165 + $0x8] sm:$0xff]
        %v198 = vld [vmem:[%s165 + $0x10] sm:$0xff]
        %v199 = vld [vmem:[%s165 + $0x18] sm:$0xff]
        %v200 = vld [vmem:[%s165 + $0x20] sm:$0xff]
        %v201 = vld [vmem:[%s165 + $0x28] sm:$0xff]
        %v202 = vld [vmem:[%s165 + $0x30] sm:$0xff]
        %v203 = vld [vmem:[%s165 + $0x38] sm:$0xff]
        %v204 = vld [vmem:[%s1] sm:$0x1]
        %v206 = vperm.slane %v204, 0
        %v208 = vmul.f32 %v196, %v206
        %v209 = vmul.f32 %v197, %v206
        %v210 = vmul.f32 %v198, %v206
        %v211 = vmul.f32 %v199, %v206
        %v212 = vmul.f32 %v200, %v206
        %v213 = vmul.f32 %v201, %v206
        %v214 = vmul.f32 %v202, %v206
        %v215 = vmul.f32 %v203, %v206
        %216 = vadd.xlane.f32.xlu0 %v208
        %v217 = vpop.xlane.xlu0 %216
        %218 = vadd.xlane.f32.xlu0 %v209
        %v219 = vpop.xlane.xlu0 %218
        %220 = vadd.xlane.f32.xlu0 %v210
        %v221 = vpop.xlane.xlu0 %220
        %222 = vadd.xlane.f32.xlu0 %v211
        %v223 = vpop.xlane.xlu0 %222
        %224 = vadd.xlane.f32.xlu0 %v212
        %v225 = vpop.xlane.xlu0 %224
        %226 = vadd.xlane.f32.xlu0 %v213
        %v227 = vpop.xlane.xlu0 %226
        %228 = vadd.xlane.f32.xlu0 %v214
        %v229 = vpop.xlane.xlu0 %228
        %230 = vadd.xlane.f32.xlu0 %v215
        %v231 = vpop.xlane.xlu0 %230
        %s232 = sld [smem:[#allocation2]]
        %v233 = vstv %s232
        %v234 = vadd.f32 %v217, %v233
        %v235 = vadd.f32 %v219, %v233
        %v236 = vadd.f32 %v221, %v233
        %v237 = vadd.f32 %v223, %v233
        %v238 = vadd.f32 %v225, %v233
        %v239 = vadd.f32 %v227, %v233
        %v240 = vadd.f32 %v229, %v233
        %v241 = vadd.f32 %v231, %v233
        %v242 = vxor.u32 %v234, 2147483648
        %v243 = vxor.u32 %v235, 2147483648
        %v244 = vxor.u32 %v236, 2147483648
        %v245 = vxor.u32 %v237, 2147483648
        %v246 = vxor.u32 %v238, 2147483648
        %v247 = vxor.u32 %v239, 2147483648
        %v248 = vxor.u32 %v240, 2147483648
        %v249 = vxor.u32 %v241, 2147483648
        %v250 = vmul.f32 %v242, 1.442695
        %v251 = vpow.pop %v250
        %v252 = vmul.f32 %v243, 1.442695
        %v253 = vpow.pop %v252
        %v254 = vmul.f32 %v244, 1.442695
        %v255 = vpow.pop %v254
        %v256 = vmul.f32 %v245, 1.442695
        %v257 = vpow.pop %v256
        %v258 = vmul.f32 %v246, 1.442695
        %v259 = vpow.pop %v258
        %v260 = vmul.f32 %v247, 1.442695
        %v261 = vpow.pop %v260
        %v262 = vmul.f32 %v248, 1.442695
        %v263 = vpow.pop %v262
        %v264 = vmul.f32 %v249, 1.442695
        %v265 = vpow.pop %v264
        %v266 = vadd.f32 %v251, 1.0
        %v267 = vadd.f32 %v253, 1.0
        %v268 = vadd.f32 %v255, 1.0
        %v269 = vadd.f32 %v257, 1.0
        %v270 = vadd.f32 %v259, 1.0
        %v271 = vadd.f32 %v261, 1.0
        %v272 = vadd.f32 %v263, 1.0
        %v273 = vadd.f32 %v265, 1.0
        %v274 = vrcp.pop %v266
        %v275 = vmul.f32 %v266, %v274
        %v276 = vsub.f32 1.0, %v275
        %v277 = vmul.f32 %v274, %v276
        %v278 = vadd.f32 %v274, %v277
        %vm279 = vweird.f32 %v266
        %vm280 = vweird.f32 %v274
        %vm281 = vmor %vm279, %vm280
        %v282 = vsel %vm281, %v274, %v278
        %v283 = vand.u32 2147483647, %v266
        %vm284 = vcmp.eq.f32.partialorder %v283, 8.507059e+37
        %v285 = vand.u32 %v266, 2147483648
        %v286 = vor.u32 1.1754944e-38, %v285
        %v287 = vsel %vm284, %v286, %v282
        %v288 = vmul.f32 1.0, %v287
        %v289 = vrcp.pop %v267
        %v290 = vmul.f32 %v267, %v289
        %v291 = vsub.f32 1.0, %v290
        %v292 = vmul.f32 %v289, %v291
        %v293 = vadd.f32 %v289, %v292
        %vm294 = vweird.f32 %v267
        %vm295 = vweird.f32 %v289
        %vm296 = vmor %vm294, %vm295
        %v297 = vsel %vm296, %v289, %v293
        %v298 = vand.u32 2147483647, %v267
        %vm299 = vcmp.eq.f32.partialorder %v298, 8.507059e+37
        %v300 = vand.u32 %v267, 2147483648
        %v301 = vor.u32 1.1754944e-38, %v300
        %v302 = vsel %vm299, %v301, %v297
        %v303 = vmul.f32 1.0, %v302
        %v304 = vrcp.pop %v268
        %v305 = vmul.f32 %v268, %v304
        %v306 = vsub.f32 1.0, %v305
        %v307 = vmul.f32 %v304, %v306
        %v308 = vadd.f32 %v304, %v307
        %vm309 = vweird.f32 %v268
        %vm310 = vweird.f32 %v304
        %vm311 = vmor %vm309, %vm310
        %v312 = vsel %vm311, %v304, %v308
        %v313 = vand.u32 2147483647, %v268
        %vm314 = vcmp.eq.f32.partialorder %v313, 8.507059e+37
        %v315 = vand.u32 %v268, 2147483648
        %v316 = vor.u32 1.1754944e-38, %v315
        %v317 = vsel %vm314, %v316, %v312
        %v318 = vmul.f32 1.0, %v317
        %v319 = vrcp.pop %v269
        %v320 = vmul.f32 %v269, %v319
        %v321 = vsub.f32 1.0, %v320
        %v322 = vmul.f32 %v319, %v321
        %v323 = vadd.f32 %v319, %v322
        %vm324 = vweird.f32 %v269
        %vm325 = vweird.f32 %v319
        %vm326 = vmor %vm324, %vm325
        %v327 = vsel %vm326, %v319, %v323
        %v328 = vand.u32 2147483647, %v269
        %vm329 = vcmp.eq.f32.partialorder %v328, 8.507059e+37
        %v330 = vand.u32 %v269, 2147483648
        %v331 = vor.u32 1.1754944e-38, %v330
        %v332 = vsel %vm329, %v331, %v327
        %v333 = vmul.f32 1.0, %v332
        %v334 = vrcp.pop %v270
        %v335 = vmul.f32 %v270, %v334
        %v336 = vsub.f32 1.0, %v335
        %v337 = vmul.f32 %v334, %v336
        %v338 = vadd.f32 %v334, %v337
        %vm339 = vweird.f32 %v270
        %vm340 = vweird.f32 %v334
        %vm341 = vmor %vm339, %vm340
        %v342 = vsel %vm341, %v334, %v338
        %v343 = vand.u32 2147483647, %v270
        %vm344 = vcmp.eq.f32.partialorder %v343, 8.507059e+37
        %v345 = vand.u32 %v270, 2147483648
        %v346 = vor.u32 1.1754944e-38, %v345
        %v347 = vsel %vm344, %v346, %v342
        %v348 = vmul.f32 1.0, %v347
        %v349 = vrcp.pop %v271
        %v350 = vmul.f32 %v271, %v349
        %v351 = vsub.f32 1.0, %v350
        %v352 = vmul.f32 %v349, %v351
        %v353 = vadd.f32 %v349, %v352
        %vm354 = vweird.f32 %v271
        %vm355 = vweird.f32 %v349
        %vm356 = vmor %vm354, %vm355
        %v357 = vsel %vm356, %v349, %v353
        %v358 = vand.u32 2147483647, %v271
        %vm359 = vcmp.eq.f32.partialorder %v358, 8.507059e+37
        %v360 = vand.u32 %v271, 2147483648
        %v361 = vor.u32 1.1754944e-38, %v360
        %v362 = vsel %vm359, %v361, %v357
        %v363 = vmul.f32 1.0, %v362
        %v364 = vrcp.pop %v272
        %v365 = vmul.f32 %v272, %v364
        %v366 = vsub.f32 1.0, %v365
        %v367 = vmul.f32 %v364, %v366
        %v368 = vadd.f32 %v364, %v367
        %vm369 = vweird.f32 %v272
        %vm370 = vweird.f32 %v364
        %vm371 = vmor %vm369, %vm370
        %v372 = vsel %vm371, %v364, %v368
        %v373 = vand.u32 2147483647, %v272
        %vm374 = vcmp.eq.f32.partialorder %v373, 8.507059e+37
        %v375 = vand.u32 %v272, 2147483648
        %v376 = vor.u32 1.1754944e-38, %v375
        %v377 = vsel %vm374, %v376, %v372
        %v378 = vmul.f32 1.0, %v377
        %v379 = vrcp.pop %v273
        %v380 = vmul.f32 %v273, %v379
        %v381 = vsub.f32 1.0, %v380
        %v382 = vmul.f32 %v379, %v381
        %v383 = vadd.f32 %v379, %v382
        %vm384 = vweird.f32 %v273
        %vm385 = vweird.f32 %v379
        %vm386 = vmor %vm384, %vm385
        %v387 = vsel %vm386, %v379, %v383
        %v388 = vand.u32 2147483647, %v273
        %vm389 = vcmp.eq.f32.partialorder %v388, 8.507059e+37
        %v390 = vand.u32 %v273, 2147483648
        %v391 = vor.u32 1.1754944e-38, %v390
        %v392 = vsel %vm389, %v391, %v387
        %v393 = vmul.f32 1.0, %v392
        %vm394 = vcmask 7168
        %395 = vst.msk [vmem:[%s194] sm:$0xff] %vm394, %v288
        %396 = vst.msk [vmem:[%s194 + $0x8] sm:$0xff] %vm394, %v303
        %397 = vst.msk [vmem:[%s194 + $0x10] sm:$0xff] %vm394, %v318
        %398 = vst.msk [vmem:[%s194 + $0x18] sm:$0xff] %vm394, %v333
        %399 = vst.msk [vmem:[%s194 + $0x20] sm:$0xff] %vm394, %v348
        %400 = vst.msk [vmem:[%s194 + $0x28] sm:$0xff] %vm394, %v363
        %401 = vst.msk [vmem:[%s194 + $0x30] sm:$0xff] %vm394, %v378
        %402 = vst.msk [vmem:[%s194 + $0x38] sm:$0xff] %vm394, %v393
        %s403 = smul.u32 8, %s18
        %p404 = scmp.lt.s32.totalorder %s403, 31
        %s405 = scalar_select %p404, %s403, 31
        %s406 = smul.addr %s405, 8
        %s407 = scalar_lea.vmem %s3, %s406
        // Predicated region
        $region37: #{tpu_custom_call.1} parent=31 // pred_check
          %p408 = pneg %p104
        $region38: #{tpu_custom_call.1} parent=31 // pred_check_branch
          %410 = sbr.rel (%p408) target = $region40
        $region39: #{tpu_custom_call.1} parent=31 // pred_region
          %s411 = smul.u32 8, %s18
        $region40: #{tpu_custom_call.1} parent=31 // pred_fallthru
          _
      $region32: #{tpu_custom_call.1} parent=5 // pred_fallthru
        _
      %p412 = scmp.le.s32.totalorder 2, %s13
      // Predicated region
      $region41: #{tpu_custom_call.1} parent=5 // pred_check
        %p413 = pneg %p412
      $region42: #{tpu_custom_call.1} parent=5 // pred_check_branch
        %415 = sbr.rel (%p413) target = $region44
      $region43: #{tpu_custom_call.1} parent=5 // pred_region
        %s416 = ssub.s32 %s13, 2
        // Predicated region
        $region45: #{tpu_custom_call.1} parent=43 // pred_check
          %p417 = pneg %p110
        $region46: #{tpu_custom_call.1} parent=43 // pred_check_branch
          %419 = sbr.rel (%p417) target = $region48
        $region47: #{tpu_custom_call.1} parent=43 // pred_region
          %s420 = smul.u32 8, %s19
          %p421 = scmp.lt.s32.totalorder %s420, 31
          %s422 = scalar_select %p421, %s420, 31
          %s423 = smul.addr %s422, 8
          %s424 = scalar_lea.vmem %s3, %s423
        $region48: #{tpu_custom_call.1} parent=43 // pred_fallthru
          _
      $region44: #{tpu_custom_call.1} parent=5 // pred_fallthru
        _
    $region6: #{tpu_custom_call.1} parent=1 // loop_footer
      %s17 = sadd.s32 1, %s13
    $region7: #{tpu_custom_call.1} parent=1 // loop_footer_branch
      %12 = sbr.rel target = $region3
    $region8: #{tpu_custom_call.1} parent=1 // loop_exit
      _
    %425 = vsyncpa [#allocation4], 1
    %s426 = scalar_lea.sflag [#allocation4], 1
    %427 = vsyncpa %s426, 1

</llo_original>
